<compile_context>
chip_gen: v7x
topology: tpu7x:2x2x1
jax: 0.10.0
libtpu: 0.0.40
codegen_flags: <defaults>
</compile_context>

<pallas_src>
import functools

import jax
import jax.numpy as jnp
from jax.experimental import pallas as pl
from jax.experimental.pallas import tpu as pltpu

EPS = 1e-6
_LANE = 128


# ---------------------------------------------------------------------------
# Hardware-aware sizing helpers
# ---------------------------------------------------------------------------
def _vmem_capacity():
    """Physical VMEM bytes of the local TPU (64 MiB v7x, 128 MiB v5e/v6e)."""
    try:
        return int(pltpu.get_tpu_info().vmem_capacity_bytes)
    except Exception:  # no TPU info available -> conservative (v7x) default
        return 64 * 1024 * 1024


def _vmem_limit(need_bytes, cap):
    """2x headroom over the estimated working set, floored at 32 MiB, < cap."""
    lim = max(2 * int(need_bytes) + (4 << 20), 32 << 20)
    return int(min(lim, int(0.9 * cap)))


def _choose_hw_tile(hw, per_lane_bytes, budget_bytes):
    """Largest 128-multiple HW tile whose live buffers fit the budget."""
    lanes = (int(budget_bytes) // max(int(per_lane_bytes), 1)) // _LANE * _LANE
    lanes = max(_LANE, min(lanes, 8192))
    hw_floor = max(_LANE, hw // _LANE * _LANE)
    return int(min(lanes, hw_floor))


# ---------------------------------------------------------------------------
# Fused single-pass kernel: stats + normalize + 1x1 conv on a resident slab.
# x is read from HBM exactly once per batch.
# ---------------------------------------------------------------------------
def _fused_kernel(x_ref, g_ref, bt_ref, w_ref, cb_ref, o_ref, *, inv_n, mm_dtype):
    xf = x_ref[0].astype(jnp.float32)                          # (C, HW)
    mean = jnp.sum(xf, axis=-1, keepdims=True) * inv_n         # (C, 1)
    ex2 = jnp.sum(xf * xf, axis=-1, keepdims=True) * inv_n
    var = jnp.maximum(ex2 - mean * mean, 0.0)
    scale = g_ref[0] * jax.lax.rsqrt(var + EPS)                # (C, 1)
    shift = bt_ref[0] - scale * mean                           # (C, 1)
    # Normalize in VMEM (lane-broadcast VPU FMA; free slack in a mem-bound
    # kernel) and run the 1x1 conv as a single MXU matmul.
    xn = (xf * scale + shift).astype(mm_dtype)                 # (C, HW)
    y = jnp.dot(w_ref[...], xn, preferred_element_type=jnp.float32)
    o_ref[0] = (y + cb_ref[...]).astype(o_ref.dtype)


# ---------------------------------------------------------------------------
# Two-pass path, kernel 1: per-(batch, channel) instance-norm statistics,
# pre-folded with the adaptive affine:
#   scale = gamma * rsqrt(var + eps),  shift = beta - scale * mean
# ---------------------------------------------------------------------------
def _stats_kernel(x_ref, g_ref, bt_ref, scale_ref, shift_ref, sum_ref, sq_ref,
                  *, inv_n, thw, hw):
    t = pl.program_id(1)

    @pl.when(t == 0)
    def _():
        sum_ref[...] = jnp.zeros_like(sum_ref)
        sq_ref[...] = jnp.zeros_like(sq_ref)

    xf = x_ref[0].astype(jnp.float32)                          # (C, thw)
    if hw % thw != 0:
        # Ragged tail tile: OOB columns hold unspecified data -> mask them.
        valid = hw - t * thw
        col = jax.lax.broadcasted_iota(jnp.int32, xf.shape, 1)
        xf = jnp.where(col < valid, xf, 0.0)

    sum_ref[...] += jnp.sum(xf, axis=-1, keepdims=True)        # (C, 1)
    sq_ref[...] += jnp.sum(xf * xf, axis=-1, keepdims=True)

    @pl.when(t == pl.num_programs(1) - 1)
    def _():
        mean = sum_ref[...] * inv_n
        var = jnp.maximum(sq_ref[...] * inv_n - mean * mean, 0.0)
        s = g_ref[0] * jax.lax.rsqrt(var + EPS)                # (C, 1)
        scale_ref[0] = s
        shift_ref[0] = bt_ref[0] - s * mean


# ---------------------------------------------------------------------------
# Two-pass path, kernel 2: apply the pre-folded conv on raw x tiles.
#   y = W'[b] @ x_tile + b'[b]      (fold done once per batch in the wrapper)
# ---------------------------------------------------------------------------
def _apply_kernel(x_ref, wf_ref, bf_ref, o_ref, *, mm_dtype):
    y = jnp.dot(wf_ref[0], x_ref[0].astype(mm_dtype),
                preferred_element_type=jnp.float32)
    o_ref[0] = (y + bf_ref[0]).astype(o_ref.dtype)


# ---------------------------------------------------------------------------
# Wrapper
# ---------------------------------------------------------------------------
def pre_instance_norm(x_nchw, gamma, beta, conv_w, conv_b,
                      *, force_two_pass=False, hw_tile=None):
    """x_nchw: (B, C, H, W); gamma/beta: (B, C); conv_w: (C, C); conv_b: (C,)."""
    B, C, H, W = x_nchw.shape
    HW = H * W
    out_dtype = x_nchw.dtype
    in_isz = jnp.dtype(x_nchw.dtype).itemsize
    out_isz = jnp.dtype(out_dtype).itemsize

    # Pure metadata reshapes / tiny casts only — no padded HBM copy of x.
    x = x_nchw.reshape(B, C, HW)
    g = gamma.astype(jnp.float32).reshape(B, C, 1)
    bt = beta.astype(jnp.float32).reshape(B, C, 1)
    w32 = conv_w.astype(jnp.float32)
    cb = conv_b.astype(jnp.float32).reshape(C, 1)

    cap = _vmem_capacity()
    mm_bf16 = C >= 128            # small C: DMA-bound, keep f32 numerics
    mm_dtype = jnp.bfloat16 if mm_bf16 else jnp.float32
    mm_isz = 2 if mm_bf16 else 4

    # ---- fused single-pass dispatch -----------------------------------------
    fused_need = (C * HW * (2 * in_isz + 2 * out_isz + 3 * 4)   # x/o dbl-buf + f32 temps
                  + C * C * (2 * 4 + mm_isz) + 16 * C * 4)
    if (not force_two_pass) and fused_need <= 0.45 * cap:
        w_mm = w32.astype(mm_dtype)
        out = pl.pallas_call(
            functools.partial(_fused_kernel, inv_n=1.0 / HW, mm_dtype=mm_dtype),
            out_shape=jax.ShapeDtypeStruct((B, C, HW), out_dtype),
            grid_spec=pltpu.PrefetchScalarGridSpec(
                num_scalar_prefetch=0,
                grid=(B,),
                in_specs=[
                    pl.BlockSpec((1, C, HW), lambda b: (b, 0, 0)),   # x slab
                    pl.BlockSpec((1, C, 1), lambda b: (b, 0, 0)),    # gamma
                    pl.BlockSpec((1, C, 1), lambda b: (b, 0, 0)),    # beta
                    pl.BlockSpec((C, C), lambda b: (0, 0)),          # conv W
                    pl.BlockSpec((C, 1), lambda b: (0, 0)),          # conv b
                ],
                out_specs=pl.BlockSpec((1, C, HW), lambda b: (b, 0, 0)),
            ),
            compiler_params=pltpu.CompilerParams(
                dimension_semantics=("parallel",),
                vmem_limit_bytes=_vmem_limit(fused_need, cap),
            ),
        )(x, g, bt, w_mm, cb)
        return out.reshape(B, C, H, W)

    # ---- pass 1: stats (larger tile than apply: no output block to buffer) --
    tile_budget = int(0.3 * cap)
    if hw_tile is not None:
        assert hw_tile % _LANE == 0
        thw_s = thw_a = int(min(hw_tile, max(_LANE, HW // _LANE * _LANE)))
    else:
        thw_s = _choose_hw_tile(HW, 2 * C * in_isz + 16 * C, tile_budget)
        thw_a = _choose_hw_tile(HW, C * (2 * in_isz + 2 * out_isz + 8),
                                tile_budget - 2 * C * C * mm_isz)
    n_s = pl.cdiv(HW, thw_s)
    n_a = pl.cdiv(HW, thw_a)

    scale, shift = pl.pallas_call(
        functools.partial(_stats_kernel, inv_n=1.0 / HW, thw=thw_s, hw=HW),
        out_shape=(jax.ShapeDtypeStruct((B, C, 1), jnp.float32),
                   jax.ShapeDtypeStruct((B, C, 1), jnp.float32)),
        grid_spec=pltpu.PrefetchScalarGridSpec(
            num_scalar_prefetch=0,
            grid=(B, n_s),
            in_specs=[
                pl.BlockSpec((1, C, thw_s), lambda b, t: (b, 0, t)),  # x tile
                pl.BlockSpec((1, C, 1), lambda b, t: (b, 0, 0)),      # gamma
                pl.BlockSpec((1, C, 1), lambda b, t: (b, 0, 0)),      # beta
            ],
            out_specs=(
                pl.BlockSpec((1, C, 1), lambda b, t: (b, 0, 0)),      # scale
                pl.BlockSpec((1, C, 1), lambda b, t: (b, 0, 0)),      # shift
            ),
            scratch_shapes=[pltpu.VMEM((C, 1), jnp.float32),
                            pltpu.VMEM((C, 1), jnp.float32)],
        ),
        compiler_params=pltpu.CompilerParams(
            dimension_semantics=("parallel", "arbitrary"),
            vmem_limit_bytes=_vmem_limit(2 * C * thw_s * in_isz + 64 * C * 4, cap),
        ),
    )(x, g, bt)

    # ---- hoisted fold (once per batch, in XLA; O(B*C^2) only) ---------------
    s2 = scale.reshape(B, C)
    d2 = shift.reshape(B, C)
    w_fold = (w32[None, :, :] * s2[:, None, :]).astype(mm_dtype)      # (B, C, C)
    b_fold = cb[None] + jnp.einsum("oc,bc->bo", w32, d2)[:, :, None]  # (B, C, 1)

    # ---- pass 2: y = W'[b] @ x_tile + b'[b] ----------------------------------
    apply_need = (C * thw_a * (2 * in_isz + 2 * out_isz + 8)
                  + 2 * C * C * mm_isz + 16 * C * 4)
    out = pl.pallas_call(
        functools.partial(_apply_kernel, mm_dtype=mm_dtype),
        out_shape=jax.ShapeDtypeStruct((B, C, HW), out_dtype),
        grid_spec=pltpu.PrefetchScalarGridSpec(
            num_scalar_prefetch=0,
            grid=(B, n_a),
            in_specs=[
                pl.BlockSpec((1, C, thw_a), lambda b, t: (b, 0, t)),  # x tile
                pl.BlockSpec((1, C, C), lambda b, t: (b, 0, 0)),      # W' (per b)
                pl.BlockSpec((1, C, 1), lambda b, t: (b, 0, 0)),      # b' (per b)
            ],
            out_specs=pl.BlockSpec((1, C, thw_a), lambda b, t: (b, 0, t)),
        ),
        compiler_params=pltpu.CompilerParams(
            dimension_semantics=("parallel", "parallel"),
            vmem_limit_bytes=_vmem_limit(apply_need, cap),
        ),
    )(x, w_fold, b_fold)
    return out.reshape(B, C, H, W)


# ---------------------------------------------------------------------------
# Pure-JAX reference
# ---------------------------------------------------------------------------
def reference(x_nchw, gamma, beta, conv_w, conv_b):
    B, C, H, W = x_nchw.shape
    x = x_nchw.reshape(B, C, H * W).astype(jnp.float32)
    mean = jnp.mean(x, axis=-1, keepdims=True)
    var = jnp.mean((x - mean) ** 2, axis=-1, keepdims=True)
    xn = (x - mean) * jax.lax.rsqrt(var + EPS)
    xn = xn * gamma[:, :, None] + beta[:, :, None]
    y = jnp.einsum("oc,bcp->bop", conv_w, xn) + conv_b[None, :, None]
    return y.reshape(B, C, H, W)


if __name__ == "__main__":
    key = jax.random.PRNGKey(0)
    kx, kg, kb, kw, kc, kx2, kg2, kb2, kw2, kc2 = jax.random.split(key, 10)

    # ---- small module-sized shapes: exercises the fused single-pass path ----
    B, C, H, W = 2, 4, 16, 16
    x = jax.random.normal(kx, (B, C, H, W), dtype=jnp.float32)
    # Adaptive (externally assigned) affine params of AdaptiveInstanceNorm2d.
    gamma = 1.0 + 0.1 * jax.random.normal(kg, (B, C), dtype=jnp.float32)
    beta = 0.1 * jax.random.normal(kb, (B, C), dtype=jnp.float32)
    # fn = Conv2d(dim, dim, kernel_size=1): deterministic synthetic init.
    conv_w = jax.random.normal(kw, (C, C), dtype=jnp.float32) / jnp.sqrt(C)
    conv_b = 0.01 * jax.random.normal(kc, (C,), dtype=jnp.float32)

    out = jax.block_until_ready(pre_instance_norm(x, gamma, beta, conv_w, conv_b))
    ref = reference(x, gamma, beta, conv_w, conv_b)
    assert out.shape == (B, C, H, W)
    # Default-precision MXU passes on f32 operands -> loose tolerance.
    assert jnp.allclose(out, ref, atol=5e-2, rtol=5e-2), float(
        jnp.max(jnp.abs(out - ref)))

    # ---- exercise the tiled two-pass fallback (multi-tile + ragged HW tail) --
    B2, C2, H2, W2 = 2, 8, 24, 24          # HW = 576 = 2*256 + 64
    x2 = jax.random.normal(kx2, (B2, C2, H2, W2), dtype=jnp.float32)
    gamma2 = 1.0 + 0.1 * jax.random.normal(kg2, (B2, C2), dtype=jnp.float32)
    beta2 = 0.1 * jax.random.normal(kb2, (B2, C2), dtype=jnp.float32)
    conv_w2 = jax.random.normal(kw2, (C2, C2), dtype=jnp.float32) / jnp.sqrt(C2)
    conv_b2 = 0.01 * jax.random.normal(kc2, (C2,), dtype=jnp.float32)

    out2 = jax.block_until_ready(
        pre_instance_norm(x2, gamma2, beta2, conv_w2, conv_b2,
                          force_two_pass=True, hw_tile=256))
    ref2 = reference(x2, gamma2, beta2, conv_w2, conv_b2)
    assert jnp.allclose(out2, ref2, atol=5e-2, rtol=5e-2), float(
        jnp.max(jnp.abs(out2 - ref2)))

    print("KERNEL_OK")
</pallas_src>

<mosaic_0001>
module attributes {stable_mosaic.version = 11 : i64} {
  func.func @_fused_kernel(%arg0: i32, %arg1: memref<1x4x256xf32, #tpu.memory_space<vmem>>, %arg2: memref<1x4x1xf32, #tpu.memory_space<vmem>>, %arg3: memref<1x4x1xf32, #tpu.memory_space<vmem>>, %arg4: memref<4x4xf32, #tpu.memory_space<vmem>>, %arg5: memref<4x1xf32, #tpu.memory_space<vmem>>, %arg6: memref<1x4x256xf32, #tpu.memory_space<vmem>>) attributes {dimension_semantics = [#tpu.dimension_semantics<parallel>], iteration_bounds = array<i64: 2>, scalar_prefetch = 0 : i64, scratch_operands = 0 : i64, tpu.core_type = #tpu.core_type<tc>, window_params = [{transform_indices = @transform_0, window_bounds = array<i64: 1, 4, 256>}, {transform_indices = @transform_1, window_bounds = array<i64: 1, 4, 1>}, {transform_indices = @transform_2, window_bounds = array<i64: 1, 4, 1>}, {pipeline_mode = #tpu.pipeline_mode<synchronous>, transform_indices = @transform_3, window_bounds = array<i64: 4, 4>}, {pipeline_mode = #tpu.pipeline_mode<synchronous>, transform_indices = @transform_4, window_bounds = array<i64: 4, 1>}, {transform_indices = @transform_5, window_bounds = array<i64: 1, 4, 256>}]} {
    %c0 = arith.constant 0 : index
    %c0_0 = arith.constant 0 : index
    %c0_1 = arith.constant 0 : index
    %0 = vector.load %arg1[%c0, %c0_0, %c0_1] : memref<1x4x256xf32, #tpu.memory_space<vmem>>, vector<1x4x256xf32>
    %1 = vector.shape_cast %0 : vector<1x4x256xf32> to vector<4x256xf32>
    %cst = arith.constant dense<0.000000e+00> : vector<4xf32>
    %2 = vector.multi_reduction <add>, %1, %cst [1] : vector<4x256xf32> to vector<4xf32>
    %3 = vector.shape_cast %2 : vector<4xf32> to vector<4x1xf32>
    %cst_2 = arith.constant 3.906250e-03 : f32
    %4 = vector.broadcast %cst_2 : f32 to vector<4x1xf32>
    %5 = arith.mulf %3, %4 : vector<4x1xf32>
    %6 = arith.mulf %1, %1 : vector<4x256xf32>
    %cst_3 = arith.constant dense<0.000000e+00> : vector<4xf32>
    %7 = vector.multi_reduction <add>, %6, %cst_3 [1] : vector<4x256xf32> to vector<4xf32>
    %8 = vector.shape_cast %7 : vector<4xf32> to vector<4x1xf32>
    %cst_4 = arith.constant 3.906250e-03 : f32
    %9 = vector.broadcast %cst_4 : f32 to vector<4x1xf32>
    %10 = arith.mulf %8, %9 : vector<4x1xf32>
    %11 = arith.mulf %5, %5 : vector<4x1xf32>
    %12 = arith.subf %10, %11 : vector<4x1xf32>
    %cst_5 = arith.constant 0.000000e+00 : f32
    %13 = vector.broadcast %cst_5 : f32 to vector<4x1xf32>
    %14 = arith.maximumf %12, %13 : vector<4x1xf32>
    %c0_6 = arith.constant 0 : index
    %c0_7 = arith.constant 0 : index
    %c0_8 = arith.constant 0 : index
    %15 = vector.load %arg2[%c0_6, %c0_7, %c0_8] : memref<1x4x1xf32, #tpu.memory_space<vmem>>, vector<1x4x1xf32>
    %16 = vector.shape_cast %15 : vector<1x4x1xf32> to vector<4x1xf32>
    %cst_9 = arith.constant 9.99999997E-7 : f32
    %17 = vector.broadcast %cst_9 : f32 to vector<4x1xf32>
    %18 = arith.addf %14, %17 : vector<4x1xf32>
    %19 = math.rsqrt %18 : vector<4x1xf32>
    %20 = arith.mulf %16, %19 : vector<4x1xf32>
    %c0_10 = arith.constant 0 : index
    %c0_11 = arith.constant 0 : index
    %c0_12 = arith.constant 0 : index
    %21 = vector.load %arg3[%c0_10, %c0_11, %c0_12] : memref<1x4x1xf32, #tpu.memory_space<vmem>>, vector<1x4x1xf32>
    %22 = vector.shape_cast %21 : vector<1x4x1xf32> to vector<4x1xf32>
    %23 = arith.mulf %20, %5 : vector<4x1xf32>
    %24 = arith.subf %22, %23 : vector<4x1xf32>
    %25 = vector.broadcast %20 : vector<4x1xf32> to vector<4x256xf32>
    %26 = arith.mulf %1, %25 : vector<4x256xf32>
    %27 = vector.broadcast %24 : vector<4x1xf32> to vector<4x256xf32>
    %28 = arith.addf %26, %27 : vector<4x256xf32>
    %c0_13 = arith.constant 0 : index
    %c0_14 = arith.constant 0 : index
    %29 = vector.load %arg4[%c0_13, %c0_14] : memref<4x4xf32, #tpu.memory_space<vmem>>, vector<4x4xf32>
    %cst_15 = arith.constant dense<0.000000e+00> : vector<4x256xf32>
    %30 = tpu.matmul %29, %28, %cst_15 {dimension_numbers = #tpu.dot_dimension_numbers<[1], [0], [0], [1], [0, 0, 1, 1], [], []>} : vector<4x4xf32>, vector<4x256xf32>, vector<4x256xf32> -> vector<4x256xf32>
    %c0_16 = arith.constant 0 : index
    %c0_17 = arith.constant 0 : index
    %31 = vector.load %arg5[%c0_16, %c0_17] : memref<4x1xf32, #tpu.memory_space<vmem>>, vector<4x1xf32>
    %32 = vector.broadcast %31 : vector<4x1xf32> to vector<4x256xf32>
    %33 = arith.addf %30, %32 : vector<4x256xf32>
    %c0_18 = arith.constant 0 : index
    %c0_19 = arith.constant 0 : index
    %c0_20 = arith.constant 0 : index
    %34 = vector.load %arg6[%c0_18, %c0_19, %c0_20] : memref<1x4x256xf32, #tpu.memory_space<vmem>>, vector<1x4x256xf32>
    %35 = vector.shape_cast %34 : vector<1x4x256xf32> to vector<4x256xf32>
    %36 = vector.shape_cast %33 : vector<4x256xf32> to vector<1x4x256xf32>
    tpu.vector_store %arg6[%c0_18, %c0_19, %c0_20], %36 {strides = array<i32>} : memref<1x4x256xf32, #tpu.memory_space<vmem>>, vector<1x4x256xf32>,
    return
  }
  func.func @transform_0(%arg0: i32) -> (i32, i32, i32) {
    %c0_i32 = arith.constant 0 : i32
    %c0_i32_0 = arith.constant 0 : i32
    %c0_i32_1 = arith.constant 0 : i32
    return %arg0, %c0_i32, %c0_i32_0 : i32, i32, i32
  }
  func.func @transform_1(%arg0: i32) -> (i32, i32, i32) {
    %c0_i32 = arith.constant 0 : i32
    %c0_i32_0 = arith.constant 0 : i32
    %c0_i32_1 = arith.constant 0 : i32
    return %arg0, %c0_i32, %c0_i32_0 : i32, i32, i32
  }
  func.func @transform_2(%arg0: i32) -> (i32, i32, i32) {
    %c0_i32 = arith.constant 0 : i32
    %c0_i32_0 = arith.constant 0 : i32
    %c0_i32_1 = arith.constant 0 : i32
    return %arg0, %c0_i32, %c0_i32_0 : i32, i32, i32
  }
  func.func @transform_3(%arg0: i32) -> (i32, i32) {
    %c0_i32 = arith.constant 0 : i32
    %c0_i32_0 = arith.constant 0 : i32
    %c0_i32_1 = arith.constant 0 : i32
    return %c0_i32, %c0_i32_0 : i32, i32
  }
  func.func @transform_4(%arg0: i32) -> (i32, i32) {
    %c0_i32 = arith.constant 0 : i32
    %c0_i32_0 = arith.constant 0 : i32
    %c0_i32_1 = arith.constant 0 : i32
    return %c0_i32, %c0_i32_0 : i32, i32
  }
  func.func @transform_5(%arg0: i32) -> (i32, i32, i32) {
    %c0_i32 = arith.constant 0 : i32
    %c0_i32_0 = arith.constant 0 : i32
    %c0_i32_1 = arith.constant 0 : i32
    return %arg0, %c0_i32, %c0_i32_0 : i32, i32, i32
  }
}

</mosaic_0001>

<llo_original>
// kernel: tpu_custom_call.1
$region0: #{tpu_custom_call.1}
  #allocation0 [shape = 'u32[]', space=smem, size = 0x4, offset = 0x4, fixed_abs, tag = 'smem constant byte address 0x4 - core index']
  #allocation1 [shape = 'u32[144,128]{1,0:T(1,128)}', space=vmem, size = 0x12000, scoped, tag = 'internal scratch']
  %s0 = inlined_call_operand.vmem [shape: f32[2,4,256], index: 0, kind: input, shape index: {}]
  %s1 = inlined_call_operand.vmem [shape: f32[2,4,1], index: 1, kind: input, shape index: {}]
  %s2 = inlined_call_operand.vmem [shape: f32[2,4,1], index: 2, kind: input, shape index: {}]
  %s3 = inlined_call_operand.vmem [shape: f32[4,4], index: 3, kind: input, shape index: {}]
  %s4 = inlined_call_operand.vmem [shape: f32[4,1], index: 4, kind: input, shape index: {}]
  %s5 = inlined_call_operand.hbm [shape: f32[2,4,256], index: 5, kind: output, shape index: {}]
  %s6 = sld [smem:[#allocation0]]
  $region53: #{tpu_custom_call.1} parent=0
    _
  %s8 = ssub.s32 1, %s6
  %s9 = scalar_select 0, %s8, %s6
  $region1: #{tpu_custom_call.1} parent=0
    #allocation2 [shape = 'u8[8192]{0}', space=vmem, size = 0x2000, scoped, tag = 'output window, operand 0']
    #allocation3 [shape = 's32[2]{0}', space=sflag, size = 0x8, scoped, tag = 'scoped memory for tpu_custom_call.1']
    %10 = vsyncpa [#allocation3], 0
    %s11 = scalar_lea.sflag [#allocation3], 1
    %12 = vsyncpa %s11, 0
    loop: start=0, step=1, limit=4
    $region2: #{tpu_custom_call.1} parent=1 // loop_pre_header
      _
    $region3: #{tpu_custom_call.1} parent=1 // loop_header
      %s14 = sphi 0, %s18
      %p15 = scmp.ge.s32.totalorder %s14, 4
      %s24 = sphi 0, %s26
      %s27 = sphi 0, %s24
      %s28 = sphi 0, %s27
      %s44 = sphi 0, %s28
      %s50 = sphi 0, %s52
      %s53 = sphi 0, %s50
      %s54 = sphi 0, %s53
      %s70 = sphi 0, %s54
      %s76 = sphi 0, %s78
      %s79 = sphi 0, %s76
      %s80 = sphi 0, %s79
      %s96 = sphi 0, %s80
      %s100 = sphi 0, %s100
      %s102 = sphi 0, %s100
      %s103 = sphi 0, %s102
      %s117 = sphi 0, %s103
      %s121 = sphi 0, %s121
      %s123 = sphi 0, %s121
      %s124 = sphi 0, %s123
      %s138 = sphi 0, %s124
      %s144 = sphi 0, %s146
      %s147 = sphi 0, %s144
      %s148 = sphi 0, %s147
      %s164 = sphi 0, %s148
    $region4: #{tpu_custom_call.1} parent=1 // loop_header_branch
      %17 = sbr.rel (%p15) target = $region8
    $region5: #{tpu_custom_call.1} parent=1 // loop_body
      %s19 = ssub.s32 %s14, 1
      %s20 = ssub.s32 %s14, 2
      %s21 = sadd.s32 %s14, 1
      %s22 = ssub.s32 %s14, %s21
      %p23 = scmp.eq.s32.totalorder %s22, 0
      %s25 = sadd.s32 %s24, 1
      %s26 = scalar_select %p23, %s24, %s25
      %p29 = pneg %p23
      %p30 = scmp.eq.s32.totalorder %s14, 1
      %p31 = por %p29, %p30
      %p32 = scmp.ne.s32.totalorder %s24, %s27
      %p33 = scmp.eq.s32.totalorder %s14, 0
      %p34 = por %p32, %p33
      %p35 = scmp.ne.s32.totalorder %s24, %s27
      %p36 = scmp.eq.s32.totalorder %s19, 1
      %p37 = por %p35, %p36
      %p38 = scmp.ne.s32.totalorder %s27, %s28
      %p39 = scmp.eq.s32.totalorder %s19, 0
      %p40 = por %p38, %p39
      %p41 = scmp.ne.s32.totalorder %s27, %s28
      %p42 = scmp.eq.s32.totalorder %s20, 1
      %p43 = por %p41, %p42
      %p45 = scmp.ne.s32.totalorder %s28, %s44
      %p46 = scmp.eq.s32.totalorder %s20, 0
      %p47 = por %p45, %p46
      %s48 = ssub.s32 %s14, %s21
      %p49 = scmp.eq.s32.totalorder %s48, 0
      %s51 = sadd.s32 %s50, 1
      %s52 = scalar_select %p49, %s50, %s51
      %p55 = pneg %p49
      %p56 = scmp.eq.s32.totalorder %s14, 1
      %p57 = por %p55, %p56
      %p58 = scmp.ne.s32.totalorder %s50, %s53
      %p59 = scmp.eq.s32.totalorder %s14, 0
      %p60 = por %p58, %p59
      %p61 = scmp.ne.s32.totalorder %s50, %s53
      %p62 = scmp.eq.s32.totalorder %s19, 1
      %p63 = por %p61, %p62
      %p64 = scmp.ne.s32.totalorder %s53, %s54
      %p65 = scmp.eq.s32.totalorder %s19, 0
      %p66 = por %p64, %p65
      %p67 = scmp.ne.s32.totalorder %s53, %s54
      %p68 = scmp.eq.s32.totalorder %s20, 1
      %p69 = por %p67, %p68
      %p71 = scmp.ne.s32.totalorder %s54, %s70
      %p72 = scmp.eq.s32.totalorder %s20, 0
      %p73 = por %p71, %p72
      %s74 = ssub.s32 %s14, %s21
      %p75 = scmp.eq.s32.totalorder %s74, 0
      %s77 = sadd.s32 %s76, 1
      %s78 = scalar_select %p75, %s76, %s77
      %p81 = pneg %p75
      %p82 = scmp.eq.s32.totalorder %s14, 1
      %p83 = por %p81, %p82
      %p84 = scmp.ne.s32.totalorder %s76, %s79
      %p85 = scmp.eq.s32.totalorder %s14, 0
      %p86 = por %p84, %p85
      %p87 = scmp.ne.s32.totalorder %s76, %s79
      %p88 = scmp.eq.s32.totalorder %s19, 1
      %p89 = por %p87, %p88
      %p90 = scmp.ne.s32.totalorder %s79, %s80
      %p91 = scmp.eq.s32.totalorder %s19, 0
      %p92 = por %p90, %p91
      %p93 = scmp.ne.s32.totalorder %s79, %s80
      %p94 = scmp.eq.s32.totalorder %s20, 1
      %p95 = por %p93, %p94
      %p97 = scmp.ne.s32.totalorder %s80, %s96
      %p98 = scmp.eq.s32.totalorder %s20, 0
      %p99 = por %p97, %p98
      %s101 = sadd.s32 %s100, 1
      %p104 = scmp.eq.s32.totalorder %s14, 1
      %p105 = scmp.ne.s32.totalorder %s100, %s102
      %p106 = scmp.eq.s32.totalorder %s14, 0
      %p107 = por %p105, %p106
      %p108 = scmp.ne.s32.totalorder %s100, %s102
      %p109 = scmp.eq.s32.totalorder %s19, 1
      %p110 = por %p108, %p109
      %p111 = scmp.ne.s32.totalorder %s102, %s103
      %p112 = scmp.eq.s32.totalorder %s19, 0
      %p113 = por %p111, %p112
      %p114 = scmp.ne.s32.totalorder %s102, %s103
      %p115 = scmp.eq.s32.totalorder %s20, 1
      %p116 = por %p114, %p115
      %p118 = scmp.ne.s32.totalorder %s103, %s117
      %p119 = scmp.eq.s32.totalorder %s20, 0
      %p120 = por %p118, %p119
      %s122 = sadd.s32 %s121, 1
      %p125 = scmp.eq.s32.totalorder %s14, 1
      %p126 = scmp.ne.s32.totalorder %s121, %s123
      %p127 = scmp.eq.s32.totalorder %s14, 0
      %p128 = por %p126, %p127
      %p129 = scmp.ne.s32.totalorder %s121, %s123
      %p130 = scmp.eq.s32.totalorder %s19, 1
      %p131 = por %p129, %p130
      %p132 = scmp.ne.s32.totalorder %s123, %s124
      %p133 = scmp.eq.s32.totalorder %s19, 0
      %p134 = por %p132, %p133
      %p135 = scmp.ne.s32.totalorder %s123, %s124
      %p136 = scmp.eq.s32.totalorder %s20, 1
      %p137 = por %p135, %p136
      %p139 = scmp.ne.s32.totalorder %s124, %s138
      %p140 = scmp.eq.s32.totalorder %s20, 0
      %p141 = por %p139, %p140
      %s142 = ssub.s32 %s14, %s21
      %p143 = scmp.eq.s32.totalorder %s142, 0
      %s145 = sadd.s32 %s144, 1
      %s146 = scalar_select %p143, %s144, %s145
      %p149 = pneg %p143
      %p150 = scmp.eq.s32.totalorder %s14, 1
      %p151 = por %p149, %p150
      %p152 = scmp.ne.s32.totalorder %s144, %s147
      %p153 = scmp.eq.s32.totalorder %s14, 0
      %p154 = por %p152, %p153
      %p155 = scmp.ne.s32.totalorder %s144, %s147
      %p156 = scmp.eq.s32.totalorder %s19, 1
      %p157 = por %p155, %p156
      %p158 = scmp.ne.s32.totalorder %s147, %s148
      %p159 = scmp.eq.s32.totalorder %s19, 0
      %p160 = por %p158, %p159
      %p161 = scmp.ne.s32.totalorder %s147, %s148
      %p162 = scmp.eq.s32.totalorder %s20, 1
      %p163 = por %p161, %p162
      %p165 = scmp.ne.s32.totalorder %s148, %s164
      %p166 = scmp.eq.s32.totalorder %s20, 0
      %p167 = por %p165, %p166
      %p168 = scmp.le.s32.totalorder 1, %s14
      %p169 = scmp.lt.s32.totalorder %s14, 3
      %p170 = pnand %p168, %p169
      %p171 = pneg %p170
      // Predicated region
      $region9: #{tpu_custom_call.1} parent=5 // pred_check
        _
      $region10: #{tpu_custom_call.1} parent=5 // pred_check_branch
        %173 = sbr.rel (%p170) target = $region12
      $region11: #{tpu_custom_call.1} parent=5 // pred_region
        %s174 = ssub.s32 %s14, 1
        // Predicated region
        $region13: #{tpu_custom_call.1} parent=11 // pred_check
          %p175 = pneg %p113
        $region14: #{tpu_custom_call.1} parent=11 // pred_check_branch
          %177 = sbr.rel (%p175) target = $region16
        $region15: #{tpu_custom_call.1} parent=11 // pred_region
          _
        $region16: #{tpu_custom_call.1} parent=11 // pred_fallthru
          _
        // Predicated region
        $region17: #{tpu_custom_call.1} parent=11 // pred_check
          %p178 = pneg %p134
        $region18: #{tpu_custom_call.1} parent=11 // pred_check_branch
          %180 = sbr.rel (%p178) target = $region20
        $region19: #{tpu_custom_call.1} parent=11 // pred_region
          _
        $region20: #{tpu_custom_call.1} parent=11 // pred_fallthru
          _
      $region12: #{tpu_custom_call.1} parent=5 // pred_fallthru
        _
      %p181 = scmp.lt.s32.totalorder %s14, 2
      // Predicated region
      $region21: #{tpu_custom_call.1} parent=5 // pred_check
        %p182 = pneg %p181
      $region22: #{tpu_custom_call.1} parent=5 // pred_check_branch
        %184 = sbr.rel (%p182) target = $region24
      $region23: #{tpu_custom_call.1} parent=5 // pred_region
        // Predicated region
        $region25: #{tpu_custom_call.1} parent=23 // pred_check
          %p185 = pneg %p34
        $region26: #{tpu_custom_call.1} parent=23 // pred_check_branch
          %187 = sbr.rel (%p185) target = $region28
        $region27: #{tpu_custom_call.1} parent=23 // pred_region
          %p188 = scmp.lt.s32.totalorder %s14, 1
          %s189 = scalar_select %p188, %s14, 1
          %s190 = smul.addr %s189, 2
          %s191 = smul.addr %s190, 4
          %s192 = scalar_lea.vmem %s0, %s191
        $region28: #{tpu_custom_call.1} parent=23 // pred_fallthru
          _
        // Predicated region
        $region29: #{tpu_custom_call.1} parent=23 // pred_check
          %p193 = pneg %p60
        $region30: #{tpu_custom_call.1} parent=23 // pred_check_branch
          %195 = sbr.rel (%p193) target = $region32
        $region31: #{tpu_custom_call.1} parent=23 // pred_region
          %p196 = scmp.lt.s32.totalorder %s14, 1
          %s197 = scalar_select %p196, %s14, 1
          %s198 = smul.addr %s197, 4
          %s199 = scalar_lea.vmem %s1, %s198
        $region32: #{tpu_custom_call.1} parent=23 // pred_fallthru
          _
        // Predicated region
        $region33: #{tpu_custom_call.1} parent=23 // pred_check
          %p200 = pneg %p86
        $region34: #{tpu_custom_call.1} parent=23 // pred_check_branch
          %202 = sbr.rel (%p200) target = $region36
        $region35: #{tpu_custom_call.1} parent=23 // pred_region
          %p203 = scmp.lt.s32.totalorder %s14, 1
          %s204 = scalar_select %p203, %s14, 1
          %s205 = smul.addr %s204, 4
          %s206 = scalar_lea.vmem %s2, %s205
        $region36: #{tpu_custom_call.1} parent=23 // pred_fallthru
          _
      $region24: #{tpu_custom_call.1} parent=5 // pred_fallthru
        _
      %p207 = scmp.le.s32.totalorder 1, %s14
      %p208 = scmp.lt.s32.totalorder %s14, 3
      %p209 = pnand %p207, %p208
      %p210 = pneg %p209
      // Predicated region
      $region37: #{tpu_custom_call.1} parent=5 // pred_check
        _
      $region38: #{tpu_custom_call.1} parent=5 // pred_check_branch
        %212 = sbr.rel (%p209) target = $region40
      $region39: #{tpu_custom_call.1} parent=5 // pred_region
        %s213 = ssub.s32 %s14, 1
        %p214 = scmp.lt.s32.totalorder %s19, 1
        %s215 = scalar_select %p214, %s19, 1
        %s216 = smul.addr %s215, 2
        %s217 = smul.addr %s216, 4
        %s218 = scalar_lea.vmem %s0, %s217
        %p219 = pneg %p40
        %p220 = pneg %p37
        %p221 = scmp.lt.s32.totalorder %s19, 1
        %s222 = scalar_select %p221, %s19, 1
        %s223 = smul.addr %s222, 4
        %s224 = scalar_lea.vmem %s1, %s223
        %p225 = pneg %p66
        %p226 = pneg %p63
        %p227 = scmp.lt.s32.totalorder %s19, 1
        %s228 = scalar_select %p227, %s19, 1
        %s229 = smul.addr %s228, 4
        %s230 = scalar_lea.vmem %s2, %s229
        %p231 = pneg %p92
        %p232 = pneg %p89
        %p233 = pneg %p113
        %p234 = pneg %p110
        %p235 = pneg %p134
        %p236 = pneg %p131
        %p237 = pneg %p160
        %p238 = pneg %p157
        %s239 = sand.u32 %s147, 1
        %s240 = scalar_lea.sflag [#allocation3], %s239
        %s241 = sand.u32 %s147, 1
        %s242 = smul.addr %s241, 8
        %s243 = scalar_lea.vmem [#allocation2], %s242
        %p244 = scmp.lt.s32.totalorder %s19, 1
        %s245 = scalar_select %p244, %s19, 1
        %s246 = smul.addr %s245, 2
        %s247 = smul.addr %s246, 4
        %s248 = scalar_lea.vmem %s0, %s247
        %p249 = scmp.lt.s32.totalorder %s19, 1
        %s250 = scalar_select %p249, %s19, 1
        %s251 = smul.addr %s250, 4
        %s252 = scalar_lea.vmem %s1, %s251
        %p253 = scmp.lt.s32.totalorder %s19, 1
        %s254 = scalar_select %p253, %s19, 1
        %s255 = smul.addr %s254, 4
        %s256 = scalar_lea.vmem %s2, %s255
        %v257 = vld [vmem:[%s248] sm:$0xff]
        %v259 = vcombine.high %v257, %v257
        %vm261 = vcmask 1043456
        %v262 = vsel %vm261, %v257, 0.0
        %v263 = vsel %vm261, %v259, 0.0
        %v264 = vadd.f32 %v262, %v263
        %265 = vadd.xlane.f32.xlu0 %v264
        %v266 = vpop.xlane.xlu0 %265
        %v267 = vmul.f32 %v266, 0.00390625
        %v268 = vmul.f32 %v257, %v257
        %v270 = vcombine.high %v268, %v268
        %v272 = vsel %vm261, %v268, 0.0
        %v273 = vsel %vm261, %v270, 0.0
        %v274 = vadd.f32 %v272, %v273
        %275 = vadd.xlane.f32.xlu0 %v274
        %v276 = vpop.xlane.xlu0 %275
        %v277 = vmul.f32 %v276, 0.00390625
        %v278 = vmul.f32 %v267, %v267
        %v279 = vsub.f32 %v277, %v278
        %v280 = vmax.f32 %v279, 0.0
        %v281 = vld [vmem:[%s252] sm:$0xf]
        %v282 = vadd.f32 %v280, 1e-06
        %v283 = vrsqrt.pop %v282
        %v284 = vmul.f32 %v281, %v283
        %v285 = vld [vmem:[%s256] sm:$0xf]
        %v286 = vmul.f32 %v284, %v267
        %v287 = vsub.f32 %v285, %v286
        %289 = vset.pattern.permute.xlu0 0
        %290 = vperm.xlu0 %289, %v284
        %v291 = vpop.permute.xlu0 %290
        %v293 = vunpack.c.l.s4 839922192
        %v294 = vunpack.c.0.s8 %v293
        %v295 = vlaneseq
        %v296 = vshrl.u32 %v295, 7
        %v297 = vsub.s32 %v294, %v296
        %v298 = vrot.slane %v291, %v297
        %v300 = vmul.f32 %v257, %v298
        %302 = vset.pattern.permute.xlu0 0
        %303 = vperm.xlu0 %302, %v287
        %v304 = vpop.permute.xlu0 %303
        %v306 = vunpack.c.l.s4 839922192
        %v307 = vunpack.c.0.s8 %v306
        %v308 = vlaneseq
        %v309 = vshrl.u32 %v308, 7
        %v310 = vsub.s32 %v307, %v309
        %v311 = vrot.slane %v304, %v310
        %v313 = vadd.f32 %v300, %v311
        %v314 = vld [vmem:[%s3] sm:$0xf]
        %v315 = vld [vmem:[%s4] sm:$0xf]
        %317 = vset.pattern.permute.xlu0 0
        %318 = vperm.xlu0 %317, %v315
        %v319 = vpop.permute.xlu0 %318
        %v322 = vcombine.high %v313, %v313
        %vm323 = vcmask 31744
        %v325 = vsel %vm323, %v314, 0
        %v327 = vsel %vm261, %v313, 0
        %v329 = vsel %vm261, %v322, 0
        %331 = vmatprep.subr.mxu0 %v329
        %332 = vmatpush1.msra.mxu0 %v327
        %333 = vmatprep.subr.mxu0 0.0
        %334 = vmatpush1.msra.mxu0 0.0
        %335 = vmatprep.subr.mxu0 0.0
        %336 = vmatpush1.msra.mxu0 0.0
        %337 = vmatprep.subr.mxu0 0.0
        %338 = vmatpush1.msra.mxu0 0.0
        %339 = vmatprep.subr.mxu0 0.0
        %340 = vmatpush1.msra.mxu0 0.0
        %341 = vmatprep.subr.mxu0 0.0
        %342 = vmatpush1.msra.mxu0 0.0
        %343 = vmatprep.subr.mxu0 0.0
        %344 = vmatpush1.msra.mxu0 0.0
        %345 = vmatprep.subr.mxu0 0.0
        %346 = vmatpush1.msra.mxu0 0.0
        %347 = vmatprep.subr.mxu0 0.0
        %348 = vmatpush1.msra.mxu0 0.0
        %349 = vmatprep.subr.mxu0 0.0
        %350 = vmatpush1.msra.mxu0 0.0
        %351 = vmatprep.subr.mxu0 0.0
        %352 = vmatpush1.msra.mxu0 0.0
        %353 = vmatprep.subr.mxu0 0.0
        %354 = vmatpush1.msra.mxu0 0.0
        %355 = vmatprep.subr.mxu0 0.0
        %356 = vmatpush1.msra.mxu0 0.0
        %357 = vmatprep.subr.mxu0 0.0
        %358 = vmatpush1.msra.mxu0 0.0
        %359 = vmatprep.subr.mxu0 0.0
        %360 = vmatpush1.msra.mxu0 0.0
        %361 = vmatprep.subr.mxu0 0.0
        %362 = vmatpush1.msra.mxu0 0.0
        %363 = vmatprep.subr.mxu0 0.0
        %364 = vmatpush1.msra.mxu0 0.0
        %365 = vmatprep.subr.mxu0 0.0
        %366 = vmatpush1.msra.mxu0 0.0
        %367 = vmatprep.subr.mxu0 0.0
        %368 = vmatpush1.msra.mxu0 0.0
        %369 = vmatprep.subr.mxu0 0.0
        %370 = vmatpush1.msra.mxu0 0.0
        %371 = vmatprep.subr.mxu0 0.0
        %372 = vmatpush1.msra.mxu0 0.0
        %373 = vmatprep.subr.mxu0 0.0
        %374 = vmatpush1.msra.mxu0 0.0
        %375 = vmatprep.subr.mxu0 0.0
        %376 = vmatpush1.msra.mxu0 0.0
        %377 = vmatprep.subr.mxu0 0.0
        %378 = vmatpush1.msra.mxu0 0.0
        %379 = vmatprep.subr.mxu0 0.0
        %380 = vmatpush1.msra.mxu0 0.0
        %381 = vmatprep.subr.mxu0 0.0
        %382 = vmatpush1.msra.mxu0 0.0
        %383 = vmatprep.subr.mxu0 0.0
        %384 = vmatpush1.msra.mxu0 0.0
        %385 = vmatprep.subr.mxu0 0.0
        %386 = vmatpush1.msra.mxu0 0.0
        %387 = vmatprep.subr.mxu0 0.0
        %388 = vmatpush1.msra.mxu0 0.0
        %389 = vmatprep.subr.mxu0 0.0
        %390 = vmatpush1.msra.mxu0 0.0
        %391 = vmatprep.subr.mxu0 0.0
        %392 = vmatpush1.msra.mxu0 0.0
        %393 = vmatprep.subr.mxu0 0.0
        %394 = vmatpush1.msra.mxu0 0.0
        %395 = vmatprep.mubr.f32.mxu0 0.0
        %396 = vmatmul.mubr.f32.gmra.mrb[0].mxu0 %v325
        %v397 = vpop.f32.mrb[0].mxu0
        %v398 = vadd.f32 %v319, %v397
        %v399 = vpop.f32.mrb[0].mxu0
        %v400 = vadd.f32 %v319, %v399
        %401 = vdwg.mxu0
        %v404 = vcombine.low %v398, %v400
        %406 = vst [vmem:[%s243] sm:$0xff] %v404
        %s407 = sand.u32 %s147, 1
        %s408 = scalar_lea.sflag [#allocation3], %s407
        %s409 = sand.u32 %s147, 1
        %s410 = smul.addr %s409, 8
        %s411 = scalar_lea.vmem [#allocation2], %s410
        // Predicated region
        $region41: #{tpu_custom_call.1} parent=39 // pred_check
          %p412 = pneg %p157
        $region42: #{tpu_custom_call.1} parent=39 // pred_check_branch
          %414 = sbr.rel (%p412) target = $region44
        $region43: #{tpu_custom_call.1} parent=39 // pred_region
          %s416 = ssub.s32 128, 128
          %417 = vsyncadd %s408, %s416
          %s418 = smul.addr %s19, 2
          %s419 = smul.addr %s418, 64
          %s420 = scalar_lea.hbm %s5, %s419
          %s422 = sshll.u32 %s411, 4
          %s423 = int_to_ptr.vmem [resolvable:$true] %s422
          %425 = dma.vmem_to_hbm [thread:$0]  %s423, 128, %s420, %s408
        $region44: #{tpu_custom_call.1} parent=39 // pred_fallthru
          _
      $region40: #{tpu_custom_call.1} parent=5 // pred_fallthru
        _
      %p426 = scmp.le.s32.totalorder 2, %s14
      // Predicated region
      $region45: #{tpu_custom_call.1} parent=5 // pred_check
        %p427 = pneg %p426
      $region46: #{tpu_custom_call.1} parent=5 // pred_check_branch
        %429 = sbr.rel (%p427) target = $region48
      $region47: #{tpu_custom_call.1} parent=5 // pred_region
        %s430 = ssub.s32 %s14, 2
        // Predicated region
        $region49: #{tpu_custom_call.1} parent=47 // pred_check
          %p431 = pneg %p163
        $region50: #{tpu_custom_call.1} parent=47 // pred_check_branch
          %433 = sbr.rel (%p431) target = $region52
        $region51: #{tpu_custom_call.1} parent=47 // pred_region
          %s434 = sand.u32 %s148, 1
          %s435 = scalar_lea.sflag [#allocation3], %s434
          %s436 = sand.u32 %s148, 1
          %s437 = smul.addr %s436, 8
          %s438 = scalar_lea.vmem [#allocation2], %s437
          %439 = dma.done %s435, 128
        $region52: #{tpu_custom_call.1} parent=47 // pred_fallthru
          _
      $region48: #{tpu_custom_call.1} parent=5 // pred_fallthru
        _
    $region6: #{tpu_custom_call.1} parent=1 // loop_footer
      %s18 = sadd.s32 1, %s14
    $region7: #{tpu_custom_call.1} parent=1 // loop_footer_branch
      %13 = sbr.rel target = $region3
    $region8: #{tpu_custom_call.1} parent=1 // loop_exit
      _
    %440 = vsyncpa [#allocation3], 1
    %s441 = scalar_lea.sflag [#allocation3], 1
    %442 = vsyncpa %s441, 1

</llo_original>
